<compile_context>
chip_gen: v5e
topology: v5e:2x2
jax: 0.10.0
libtpu: 0.0.40
codegen_flags: <defaults>
</compile_context>

<pallas_src>
import math

import jax
import jax.numpy as jnp
from jax import lax
from jax.experimental import pallas as pl
from jax.experimental.pallas import tpu as pltpu

_SQRT2 = math.sqrt(2.0)
_NEG_SLOPE = 0.2          # FusedLeakyReLU negative slope
_ACT_SCALE = _SQRT2       # FusedLeakyReLU scale (2 ** 0.5)


def _round_up(n, m):
    return ((n + m - 1) // m) * m


# --------------------------------------------------------------------------
# Kernel 1: 3x3 stride-1 conv (weights pre-scaled) + FusedLeakyReLU.
# Input is the zero-padded feature map flattened over (Hp*Wp) with row stride
# `wp`; each conv tap is a contiguous slice of that flat axis, so in-kernel
# im2col is 9 static slices copied into a VMEM scratch, then a single matmul.
# --------------------------------------------------------------------------
def _make_conv_act_kernel(kh, kw, cin, wp, lout):
    taps = [(a, b) for a in range(kh) for b in range(kw)]

    def kernel(xflat_ref, w_ref, b_ref, out_ref, patch):
        for t, (a, b) in enumerate(taps):            # static, unrolled
            off = a * wp + b
            patch[t * cin:(t + 1) * cin, :] = xflat_ref[:, off:off + lout]
        z = jnp.dot(w_ref[...], patch[...], preferred_element_type=jnp.float32)
        z = z + b_ref[...]                            # FusedLeakyReLU bias
        z = jnp.where(z >= 0, z, _NEG_SLOPE * z) * _ACT_SCALE
        out_ref[...] = z

    return kernel


# --------------------------------------------------------------------------
# Kernel 2: fused downsample stage.
#   main: (blur ∘ 3x3 s2 EqualConv2d) expressed as a 3x3 s1 conv on the
#         space-to-depth input, + FusedLeakyReLU
#   skip: (blur ∘ 1x1 s2 EqualConv2d) expressed as a 2x2 s1 conv on the
#         space-to-depth input (no bias / activation)
#   out = (main + skip) / sqrt(2)
# Both inputs share the same flattened row stride `wp`, so the two matmul
# outputs align position-wise and the residual combine fuses in-kernel.
# --------------------------------------------------------------------------
def _make_down_fuse_kernel(cin, wp, lout):
    taps_m = [(a, b) for a in range(3) for b in range(3)]
    taps_s = [(a, b) for a in range(2) for b in range(2)]
    inv_sqrt2 = 1.0 / _SQRT2

    def kernel(yflat_ref, xflat_ref, w2_ref, b2_ref, wsk_ref, out_ref, pm, ps):
        for t, (a, b) in enumerate(taps_m):
            off = a * wp + b
            pm[t * cin:(t + 1) * cin, :] = yflat_ref[:, off:off + lout]
        for t, (a, b) in enumerate(taps_s):
            off = a * wp + b
            ps[t * cin:(t + 1) * cin, :] = xflat_ref[:, off:off + lout]

        main = jnp.dot(w2_ref[...], pm[...], preferred_element_type=jnp.float32)
        main = main + b2_ref[...]
        main = jnp.where(main >= 0, main, _NEG_SLOPE * main) * _ACT_SCALE

        skip = jnp.dot(wsk_ref[...], ps[...], preferred_element_type=jnp.float32)

        out_ref[...] = (main + skip) * inv_sqrt2

    return kernel


# --------------------------------------------------------------------------
# Wrapper: ResBlock.forward
# --------------------------------------------------------------------------
def resblock_forward(x, params, resample_kernel=(1, 3, 3, 1)):
    """x: (b, ic, h, w) NCHW float32.  params:
         w1     (ic, ic, 3, 3)  conv1 EqualConv2d weight
         b1     (ic,)           conv1 FusedLeakyReLU bias
         w2     (oc, ic, 3, 3)  conv2 EqualConv2d weight
         b2     (oc,)           conv2 FusedLeakyReLU bias
         w_skip (oc, ic, 1, 1)  skip EqualConv2d weight (no bias)
    Returns (b, oc, h//2, w//2)."""
    x = x.astype(jnp.float32)
    b, ic, h, w = x.shape
    assert h % 2 == 0 and w % 2 == 0
    w1 = params["w1"].astype(jnp.float32)
    b1 = params["b1"].astype(jnp.float32)
    w2 = params["w2"].astype(jnp.float32)
    b2 = params["b2"].astype(jnp.float32)
    wsk = params["w_skip"].astype(jnp.float32)
    oc = w2.shape[0]

    # ---- blur kernel (UpFirDnSmooth), flipped once as upfirdn2d does -------
    k1d = jnp.asarray(resample_kernel, jnp.float32)
    blur = k1d[None, :] * k1d[:, None]
    blur = blur / jnp.sum(blur)
    blur_f = blur[::-1, ::-1]

    s1 = 1.0 / math.sqrt(ic * 9)     # EqualConv2d scales
    s2 = 1.0 / math.sqrt(ic * 9)
    ssk = 1.0 / math.sqrt(ic)

    # ---- one-time weight prep (plain JAX): fold scales, compose the blur
    #      into the stride-2 convs, space-to-depth reorg, flatten for matmul.
    w1_flat = (w1 * s1).transpose(0, 2, 3, 1).reshape(ic, 9 * ic)
    b1_col = b1[:, None]

    # conv2: blur(4x4, pad2) ∘ conv(3x3, s2)  ==  6x6 s2 conv with W_eff
    w2s = w2 * s2
    w_eff = jnp.zeros((oc, ic, 6, 6), jnp.float32)
    for p in range(3):
        for q in range(3):
            w_eff = w_eff.at[:, :, p:p + 4, q:q + 4].add(
                w2s[:, :, p, q][:, :, None, None] * blur_f[None, None])
    # space-to-depth: 6x6 s2 conv -> 3x3 s1 conv over 4*ic channels
    w2_s2d = (w_eff.reshape(oc, ic, 3, 2, 3, 2)
                   .transpose(0, 1, 3, 5, 2, 4)
                   .reshape(oc, 4 * ic, 3, 3))
    w2_flat = w2_s2d.transpose(0, 2, 3, 1).reshape(oc, 9 * 4 * ic)
    b2_col = b2[:, None]

    # skip: blur(4x4, pad1) ∘ conv(1x1, s2)  ==  4x4 s2 conv -> 2x2 s1 conv
    wsk_eff = (wsk[:, :, 0, 0] * ssk)[:, :, None, None] * blur_f[None, None]
    wsk_s2d = (wsk_eff.reshape(oc, ic, 2, 2, 2, 2)
                      .transpose(0, 1, 3, 5, 2, 4)
                      .reshape(oc, 4 * ic, 2, 2))
    wsk_flat = wsk_s2d.transpose(0, 2, 3, 1).reshape(oc, 4 * 4 * ic)

    # =============== stage 1: conv1 (3x3 s1) + FusedLeakyReLU ===============
    wp1 = w + 2
    lout1 = h * wp1
    lin1 = _round_up((h + 2) * wp1 + 2, 128)
    xf1 = jnp.pad(x, ((0, 0), (0, 0), (1, 1), (1, 1))).reshape(b, ic, (h + 2) * wp1)
    xf1 = jnp.pad(xf1, ((0, 0), (0, 0), (0, lin1 - (h + 2) * wp1)))

    kern1 = _make_conv_act_kernel(3, 3, ic, wp1, lout1)
    y_flat = pl.pallas_call(
        kern1,
        out_shape=jax.ShapeDtypeStruct((b, ic, lout1), jnp.float32),
        grid_spec=pltpu.PrefetchScalarGridSpec(
            num_scalar_prefetch=0,
            grid=(b,),
            in_specs=[
                pl.BlockSpec((None, ic, lin1), lambda i: (i, 0, 0)),
                pl.BlockSpec((ic, 9 * ic), lambda i: (0, 0)),
                pl.BlockSpec((ic, 1), lambda i: (0, 0)),
            ],
            out_specs=pl.BlockSpec((None, ic, lout1), lambda i: (i, 0, 0)),
            scratch_shapes=[pltpu.VMEM((9 * ic, lout1), jnp.float32)],
        ),
        compiler_params=pltpu.CompilerParams(dimension_semantics=("parallel",)),
    )(xf1, w1_flat, b1_col)
    y = y_flat.reshape(b, ic, h, wp1)[:, :, :, :w]      # drop junk columns

    # ====== stage 2: fused conv2(3x3 s2)+act  &  skip(1x1 s2)  + combine ====
    h2, wo2 = h // 2, w // 2
    wp2 = wo2 + 2
    lout2 = h2 * wp2

    # main-branch input: pad conv1 output by 2, space-to-depth, flatten
    yp = jnp.pad(y, ((0, 0), (0, 0), (2, 2), (2, 2)))
    y_s2d = (yp.reshape(b, ic, h2 + 2, 2, wp2, 2)
               .transpose(0, 1, 3, 5, 2, 4)
               .reshape(b, 4 * ic, h2 + 2, wp2))
    lin_m = _round_up((h2 + 2) * wp2 + 2, 128)
    yf = jnp.pad(y_s2d.reshape(b, 4 * ic, (h2 + 2) * wp2),
                 ((0, 0), (0, 0), (0, lin_m - (h2 + 2) * wp2)))

    # skip-branch input: pad x by (1,1)/(1,3) (right extra is zeros so the
    # flattened row stride matches the main branch), space-to-depth, flatten
    xps = jnp.pad(x, ((0, 0), (0, 0), (1, 1), (1, 3)))
    x_s2d = (xps.reshape(b, ic, h2 + 1, 2, wp2, 2)
                .transpose(0, 1, 3, 5, 2, 4)
                .reshape(b, 4 * ic, h2 + 1, wp2))
    lin_s = _round_up((h2 + 1) * wp2 + 1, 128)
    xfs = jnp.pad(x_s2d.reshape(b, 4 * ic, (h2 + 1) * wp2),
                  ((0, 0), (0, 0), (0, lin_s - (h2 + 1) * wp2)))

    kern2 = _make_down_fuse_kernel(4 * ic, wp2, lout2)
    out_flat = pl.pallas_call(
        kern2,
        out_shape=jax.ShapeDtypeStruct((b, oc, lout2), jnp.float32),
        grid_spec=pltpu.PrefetchScalarGridSpec(
            num_scalar_prefetch=0,
            grid=(b,),
            in_specs=[
                pl.BlockSpec((None, 4 * ic, lin_m), lambda i: (i, 0, 0)),
                pl.BlockSpec((None, 4 * ic, lin_s), lambda i: (i, 0, 0)),
                pl.BlockSpec((oc, 36 * ic), lambda i: (0, 0)),
                pl.BlockSpec((oc, 1), lambda i: (0, 0)),
                pl.BlockSpec((oc, 16 * ic), lambda i: (0, 0)),
            ],
            out_specs=pl.BlockSpec((None, oc, lout2), lambda i: (i, 0, 0)),
            scratch_shapes=[pltpu.VMEM((36 * ic, lout2), jnp.float32),
                            pltpu.VMEM((16 * ic, lout2), jnp.float32)],
        ),
        compiler_params=pltpu.CompilerParams(dimension_semantics=("parallel",)),
    )(yf, xfs, w2_flat, b2_col, wsk_flat)

    out = out_flat.reshape(b, oc, h2, wp2)[:, :, :, :wo2]
    return out


# --------------------------------------------------------------------------
# Pure-JAX reference: direct port of the PyTorch forward (no weight folding),
# used only for numerical validation.
# --------------------------------------------------------------------------
def _blur_ref(x, kf, pad):
    c = x.shape[1]
    wk = jnp.tile(kf[None, None], (c, 1, 1, 1))
    return lax.conv_general_dilated(
        x, wk, (1, 1), [(pad, pad), (pad, pad)],
        dimension_numbers=("NCHW", "OIHW", "NCHW"), feature_group_count=c)


def resblock_reference(x, params, resample_kernel=(1, 3, 3, 1)):
    ic = x.shape[1]
    k1d = jnp.asarray(resample_kernel, jnp.float32)
    blur = k1d[None, :] * k1d[:, None]
    blur = blur / jnp.sum(blur)
    blur_f = blur[::-1, ::-1]
    s1 = 1.0 / math.sqrt(ic * 9)
    s2 = 1.0 / math.sqrt(ic * 9)
    ssk = 1.0 / math.sqrt(ic)

    def conv(xx, ww, stride, pad):
        return lax.conv_general_dilated(
            xx, ww, (stride, stride), [(pad, pad), (pad, pad)],
            dimension_numbers=("NCHW", "OIHW", "NCHW"))

    def fused_lrelu(xx, bias):
        t = xx + bias[None, :, None, None]
        return jnp.where(t >= 0, t, 0.2 * t) * math.sqrt(2.0)

    y = fused_lrelu(conv(x, params["w1"] * s1, 1, 1), params["b1"])
    z = fused_lrelu(conv(_blur_ref(y, blur_f, 2), params["w2"] * s2, 2, 0),
                    params["b2"])
    s = conv(_blur_ref(x, blur_f, 1), params["w_skip"] * ssk, 2, 0)
    return (z + s) / math.sqrt(2.0)


if __name__ == "__main__":
    key = jax.random.PRNGKey(0)
    ks = jax.random.split(key, 6)

    # small, TPU-friendly shapes: batch=2, in_c=8, out_c=16, spatial 16x16
    b, ic, oc, h, w = 2, 8, 16, 16, 16

    x = jax.random.normal(ks[0], (b, ic, h, w), dtype=jnp.float32)
    params = {
        "w1": jax.random.normal(ks[1], (ic, ic, 3, 3), dtype=jnp.float32),
        "b1": 0.1 * jax.random.normal(ks[2], (ic,), dtype=jnp.float32),
        "w2": jax.random.normal(ks[3], (oc, ic, 3, 3), dtype=jnp.float32),
        "b2": 0.1 * jax.random.normal(ks[4], (oc,), dtype=jnp.float32),
        "w_skip": jax.random.normal(ks[5], (oc, ic, 1, 1), dtype=jnp.float32),
    }

    out = resblock_forward(x, params)
    out = jax.block_until_ready(out)

    ref = resblock_reference(x, params)
    assert out.shape == (b, oc, h // 2, w // 2), out.shape
    max_err = float(jnp.max(jnp.abs(out - ref)))
    assert jnp.allclose(out, ref, atol=2e-3, rtol=2e-3), f"max abs err {max_err}"

    print("KERNEL_OK")
</pallas_src>

<mosaic_0001>
module attributes {stable_mosaic.version = 11 : i64} {
  func.func @kernel(%arg0: i32, %arg1: memref<1x8x384xf32, #tpu.memory_space<vmem>>, %arg2: memref<8x72xf32, #tpu.memory_space<vmem>>, %arg3: memref<8x1xf32, #tpu.memory_space<vmem>>, %arg4: memref<1x8x288xf32, #tpu.memory_space<vmem>>, %arg5: memref<72x288xf32, #tpu.memory_space<vmem>>) attributes {dimension_semantics = [#tpu.dimension_semantics<parallel>], iteration_bounds = array<i64: 2>, scalar_prefetch = 0 : i64, scratch_operands = 1 : i64, tpu.core_type = #tpu.core_type<tc>, window_params = [{transform_indices = @transform_0, window_bounds = array<i64: 1, 8, 384>}, {pipeline_mode = #tpu.pipeline_mode<synchronous>, transform_indices = @transform_1, window_bounds = array<i64: 8, 72>}, {pipeline_mode = #tpu.pipeline_mode<synchronous>, transform_indices = @transform_2, window_bounds = array<i64: 8, 1>}, {transform_indices = @transform_3, window_bounds = array<i64: 1, 8, 288>}]} {
    %c0 = arith.constant 0 : index
    %c0_0 = arith.constant 0 : index
    %c0_1 = arith.constant 0 : index
    %0 = vector.load %arg1[%c0, %c0_0, %c0_1] : memref<1x8x384xf32, #tpu.memory_space<vmem>>, vector<1x8x288xf32>
    %1 = vector.shape_cast %0 : vector<1x8x288xf32> to vector<8x288xf32>
    %c0_2 = arith.constant 0 : index
    %c0_3 = arith.constant 0 : index
    %2 = vector.load %arg5[%c0_2, %c0_3] : memref<72x288xf32, #tpu.memory_space<vmem>>, vector<8x288xf32>
    tpu.vector_store %arg5[%c0_2, %c0_3], %1 {strides = array<i32>} : memref<72x288xf32, #tpu.memory_space<vmem>>, vector<8x288xf32>,
    %c0_4 = arith.constant 0 : index
    %c0_5 = arith.constant 0 : index
    %c1 = arith.constant 1 : index
    %3 = vector.load %arg1[%c0_4, %c0_5, %c1] : memref<1x8x384xf32, #tpu.memory_space<vmem>>, vector<1x8x288xf32>
    %4 = vector.shape_cast %3 : vector<1x8x288xf32> to vector<8x288xf32>
    %c8 = arith.constant 8 : index
    %c0_6 = arith.constant 0 : index
    %5 = vector.load %arg5[%c8, %c0_6] : memref<72x288xf32, #tpu.memory_space<vmem>>, vector<8x288xf32>
    tpu.vector_store %arg5[%c8, %c0_6], %4 {strides = array<i32>} : memref<72x288xf32, #tpu.memory_space<vmem>>, vector<8x288xf32>,
    %c0_7 = arith.constant 0 : index
    %c0_8 = arith.constant 0 : index
    %c2 = arith.constant 2 : index
    %6 = vector.load %arg1[%c0_7, %c0_8, %c2] : memref<1x8x384xf32, #tpu.memory_space<vmem>>, vector<1x8x288xf32>
    %7 = vector.shape_cast %6 : vector<1x8x288xf32> to vector<8x288xf32>
    %c16 = arith.constant 16 : index
    %c0_9 = arith.constant 0 : index
    %8 = vector.load %arg5[%c16, %c0_9] : memref<72x288xf32, #tpu.memory_space<vmem>>, vector<8x288xf32>
    tpu.vector_store %arg5[%c16, %c0_9], %7 {strides = array<i32>} : memref<72x288xf32, #tpu.memory_space<vmem>>, vector<8x288xf32>,
    %c0_10 = arith.constant 0 : index
    %c0_11 = arith.constant 0 : index
    %c18 = arith.constant 18 : index
    %9 = vector.load %arg1[%c0_10, %c0_11, %c18] : memref<1x8x384xf32, #tpu.memory_space<vmem>>, vector<1x8x288xf32>
    %10 = vector.shape_cast %9 : vector<1x8x288xf32> to vector<8x288xf32>
    %c24 = arith.constant 24 : index
    %c0_12 = arith.constant 0 : index
    %11 = vector.load %arg5[%c24, %c0_12] : memref<72x288xf32, #tpu.memory_space<vmem>>, vector<8x288xf32>
    tpu.vector_store %arg5[%c24, %c0_12], %10 {strides = array<i32>} : memref<72x288xf32, #tpu.memory_space<vmem>>, vector<8x288xf32>,
    %c0_13 = arith.constant 0 : index
    %c0_14 = arith.constant 0 : index
    %c19 = arith.constant 19 : index
    %12 = vector.load %arg1[%c0_13, %c0_14, %c19] : memref<1x8x384xf32, #tpu.memory_space<vmem>>, vector<1x8x288xf32>
    %13 = vector.shape_cast %12 : vector<1x8x288xf32> to vector<8x288xf32>
    %c32 = arith.constant 32 : index
    %c0_15 = arith.constant 0 : index
    %14 = vector.load %arg5[%c32, %c0_15] : memref<72x288xf32, #tpu.memory_space<vmem>>, vector<8x288xf32>
    tpu.vector_store %arg5[%c32, %c0_15], %13 {strides = array<i32>} : memref<72x288xf32, #tpu.memory_space<vmem>>, vector<8x288xf32>,
    %c0_16 = arith.constant 0 : index
    %c0_17 = arith.constant 0 : index
    %c20 = arith.constant 20 : index
    %15 = vector.load %arg1[%c0_16, %c0_17, %c20] : memref<1x8x384xf32, #tpu.memory_space<vmem>>, vector<1x8x288xf32>
    %16 = vector.shape_cast %15 : vector<1x8x288xf32> to vector<8x288xf32>
    %c40 = arith.constant 40 : index
    %c0_18 = arith.constant 0 : index
    %17 = vector.load %arg5[%c40, %c0_18] : memref<72x288xf32, #tpu.memory_space<vmem>>, vector<8x288xf32>
    tpu.vector_store %arg5[%c40, %c0_18], %16 {strides = array<i32>} : memref<72x288xf32, #tpu.memory_space<vmem>>, vector<8x288xf32>,
    %c0_19 = arith.constant 0 : index
    %c0_20 = arith.constant 0 : index
    %c36 = arith.constant 36 : index
    %18 = vector.load %arg1[%c0_19, %c0_20, %c36] : memref<1x8x384xf32, #tpu.memory_space<vmem>>, vector<1x8x288xf32>
    %19 = vector.shape_cast %18 : vector<1x8x288xf32> to vector<8x288xf32>
    %c48 = arith.constant 48 : index
    %c0_21 = arith.constant 0 : index
    %20 = vector.load %arg5[%c48, %c0_21] : memref<72x288xf32, #tpu.memory_space<vmem>>, vector<8x288xf32>
    tpu.vector_store %arg5[%c48, %c0_21], %19 {strides = array<i32>} : memref<72x288xf32, #tpu.memory_space<vmem>>, vector<8x288xf32>,
    %c0_22 = arith.constant 0 : index
    %c0_23 = arith.constant 0 : index
    %c37 = arith.constant 37 : index
    %21 = vector.load %arg1[%c0_22, %c0_23, %c37] : memref<1x8x384xf32, #tpu.memory_space<vmem>>, vector<1x8x288xf32>
    %22 = vector.shape_cast %21 : vector<1x8x288xf32> to vector<8x288xf32>
    %c56 = arith.constant 56 : index
    %c0_24 = arith.constant 0 : index
    %23 = vector.load %arg5[%c56, %c0_24] : memref<72x288xf32, #tpu.memory_space<vmem>>, vector<8x288xf32>
    tpu.vector_store %arg5[%c56, %c0_24], %22 {strides = array<i32>} : memref<72x288xf32, #tpu.memory_space<vmem>>, vector<8x288xf32>,
    %c0_25 = arith.constant 0 : index
    %c0_26 = arith.constant 0 : index
    %c38 = arith.constant 38 : index
    %24 = vector.load %arg1[%c0_25, %c0_26, %c38] : memref<1x8x384xf32, #tpu.memory_space<vmem>>, vector<1x8x288xf32>
    %25 = vector.shape_cast %24 : vector<1x8x288xf32> to vector<8x288xf32>
    %c64 = arith.constant 64 : index
    %c0_27 = arith.constant 0 : index
    %26 = vector.load %arg5[%c64, %c0_27] : memref<72x288xf32, #tpu.memory_space<vmem>>, vector<8x288xf32>
    tpu.vector_store %arg5[%c64, %c0_27], %25 {strides = array<i32>} : memref<72x288xf32, #tpu.memory_space<vmem>>, vector<8x288xf32>,
    %c0_28 = arith.constant 0 : index
    %c0_29 = arith.constant 0 : index
    %27 = vector.load %arg2[%c0_28, %c0_29] : memref<8x72xf32, #tpu.memory_space<vmem>>, vector<8x72xf32>
    %c0_30 = arith.constant 0 : index
    %c0_31 = arith.constant 0 : index
    %28 = vector.load %arg5[%c0_30, %c0_31] : memref<72x288xf32, #tpu.memory_space<vmem>>, vector<72x288xf32>
    %cst = arith.constant dense<0.000000e+00> : vector<8x288xf32>
    %29 = tpu.matmul %27, %28, %cst {dimension_numbers = #tpu.dot_dimension_numbers<[1], [0], [0], [1], [0, 0, 1, 1], [], []>} : vector<8x72xf32>, vector<72x288xf32>, vector<8x288xf32> -> vector<8x288xf32>
    %c0_32 = arith.constant 0 : index
    %c0_33 = arith.constant 0 : index
    %30 = vector.load %arg3[%c0_32, %c0_33] : memref<8x1xf32, #tpu.memory_space<vmem>>, vector<8x1xf32>
    %31 = vector.broadcast %30 : vector<8x1xf32> to vector<8x288xf32>
    %32 = arith.addf %29, %31 : vector<8x288xf32>
    %cst_34 = arith.constant 0.000000e+00 : f32
    %33 = vector.broadcast %cst_34 : f32 to vector<8x288xf32>
    %34 = arith.cmpf oge, %32, %33 : vector<8x288xf32>
    %cst_35 = arith.constant 2.000000e-01 : f32
    %35 = vector.broadcast %cst_35 : f32 to vector<8x288xf32>
    %36 = arith.mulf %35, %32 : vector<8x288xf32>
    %37 = arith.select %34, %32, %36 : vector<8x288xi1>, vector<8x288xf32>
    %cst_36 = arith.constant 1.41421354 : f32
    %38 = vector.broadcast %cst_36 : f32 to vector<8x288xf32>
    %39 = arith.mulf %37, %38 : vector<8x288xf32>
    %c0_37 = arith.constant 0 : index
    %c0_38 = arith.constant 0 : index
    %c0_39 = arith.constant 0 : index
    %40 = vector.load %arg4[%c0_37, %c0_38, %c0_39] : memref<1x8x288xf32, #tpu.memory_space<vmem>>, vector<1x8x288xf32>
    %41 = vector.shape_cast %40 : vector<1x8x288xf32> to vector<8x288xf32>
    %42 = vector.shape_cast %39 : vector<8x288xf32> to vector<1x8x288xf32>
    tpu.vector_store %arg4[%c0_37, %c0_38, %c0_39], %42 {strides = array<i32>} : memref<1x8x288xf32, #tpu.memory_space<vmem>>, vector<1x8x288xf32>,
    return
  }
  func.func @transform_0(%arg0: i32) -> (i32, i32, i32) {
    %c0_i32 = arith.constant 0 : i32
    %c0_i32_0 = arith.constant 0 : i32
    %c0_i32_1 = arith.constant 0 : i32
    return %arg0, %c0_i32, %c0_i32_0 : i32, i32, i32
  }
  func.func @transform_1(%arg0: i32) -> (i32, i32) {
    %c0_i32 = arith.constant 0 : i32
    %c0_i32_0 = arith.constant 0 : i32
    %c0_i32_1 = arith.constant 0 : i32
    return %c0_i32, %c0_i32_0 : i32, i32
  }
  func.func @transform_2(%arg0: i32) -> (i32, i32) {
    %c0_i32 = arith.constant 0 : i32
    %c0_i32_0 = arith.constant 0 : i32
    %c0_i32_1 = arith.constant 0 : i32
    return %c0_i32, %c0_i32_0 : i32, i32
  }
  func.func @transform_3(%arg0: i32) -> (i32, i32, i32) {
    %c0_i32 = arith.constant 0 : i32
    %c0_i32_0 = arith.constant 0 : i32
    %c0_i32_1 = arith.constant 0 : i32
    return %arg0, %c0_i32, %c0_i32_0 : i32, i32, i32
  }
}

</mosaic_0001>

<llo_original>
// kernel: tpu_custom_call.1
$region0: #{tpu_custom_call.1}
  #allocation0 [shape = 'u32[]', space=smem, size = 0x4, offset = 0x4, fixed_abs, tag = 'smem constant byte address 0x4 - core index']
  #allocation1 [shape = 'u32[72,128]{1,0:T(1,128)}', space=vmem, size = 0x9000, scoped, tag = 'internal scratch']
  #allocation2 [shape = 'f32[72,288]{1,0:T(8,128)}', space=vmem, size = 0x1b000, scoped, tag = 'scratch operand']
  %s0 = inlined_call_operand.hbm [shape: f32[2,8,384], index: 0, kind: input, shape index: {}]
  %s1 = inlined_call_operand.vmem [shape: f32[8,72], index: 1, kind: input, shape index: {}]
  %s2 = inlined_call_operand.vmem [shape: f32[8,1], index: 2, kind: input, shape index: {}]
  %s3 = inlined_call_operand.hbm [shape: f32[2,8,288], index: 3, kind: output, shape index: {}]
  %s4 = sld [smem:[#allocation0]]
  $region49: #{tpu_custom_call.1} parent=0
    _
  %s6 = ssub.s32 1, %s4
  %s7 = scalar_select 0, %s6, %s4
  $region1: #{tpu_custom_call.1} parent=0
    #allocation3 [shape = 'u8[24576]{0}', space=vmem, size = 0x6000, scoped, tag = 'input window, operand 0']
    #allocation4 [shape = 's32[2]{0}', space=sflag, size = 0x8, scoped, tag = 'scoped memory for tpu_custom_call.1']
    #allocation5 [shape = 's32[2]{0}', space=sflag, size = 0x8, scoped, tag = 'scoped memory for tpu_custom_call.1']
    #allocation6 [shape = 'u8[24576]{0}', space=vmem, size = 0x6000, scoped, tag = 'output window, operand 0']
    %8 = vsyncpa [#allocation4], 0
    %s9 = scalar_lea.sflag [#allocation4], 1
    %10 = vsyncpa %s9, 0
    %11 = vsyncpa [#allocation5], 0
    %s12 = scalar_lea.sflag [#allocation5], 1
    %13 = vsyncpa %s12, 0
    loop: start=0, step=1, limit=4
    $region2: #{tpu_custom_call.1} parent=1 // loop_pre_header
      _
    $region3: #{tpu_custom_call.1} parent=1 // loop_header
      %s15 = sphi 0, %s19
      %p16 = scmp.ge.s32.totalorder %s15, 4
      %s25 = sphi 0, %s27
      %s28 = sphi 0, %s25
      %s29 = sphi 0, %s28
      %s45 = sphi 0, %s29
      %s49 = sphi 0, %s49
      %s51 = sphi 0, %s49
      %s52 = sphi 0, %s51
      %s66 = sphi 0, %s52
      %s70 = sphi 0, %s70
      %s72 = sphi 0, %s70
      %s73 = sphi 0, %s72
      %s87 = sphi 0, %s73
      %s93 = sphi 0, %s95
      %s96 = sphi 0, %s93
      %s97 = sphi 0, %s96
      %s113 = sphi 0, %s97
    $region4: #{tpu_custom_call.1} parent=1 // loop_header_branch
      %18 = sbr.rel (%p16) target = $region8
    $region5: #{tpu_custom_call.1} parent=1 // loop_body
      %s20 = ssub.s32 %s15, 1
      %s21 = ssub.s32 %s15, 2
      %s22 = sadd.s32 %s15, 1
      %s23 = ssub.s32 %s15, %s22
      %p24 = scmp.eq.s32.totalorder %s23, 0
      %s26 = sadd.s32 %s25, 1
      %s27 = scalar_select %p24, %s25, %s26
      %p30 = pneg %p24
      %p31 = scmp.eq.s32.totalorder %s15, 1
      %p32 = por %p30, %p31
      %p33 = scmp.ne.s32.totalorder %s25, %s28
      %p34 = scmp.eq.s32.totalorder %s15, 0
      %p35 = por %p33, %p34
      %p36 = scmp.ne.s32.totalorder %s25, %s28
      %p37 = scmp.eq.s32.totalorder %s20, 1
      %p38 = por %p36, %p37
      %p39 = scmp.ne.s32.totalorder %s28, %s29
      %p40 = scmp.eq.s32.totalorder %s20, 0
      %p41 = por %p39, %p40
      %p42 = scmp.ne.s32.totalorder %s28, %s29
      %p43 = scmp.eq.s32.totalorder %s21, 1
      %p44 = por %p42, %p43
      %p46 = scmp.ne.s32.totalorder %s29, %s45
      %p47 = scmp.eq.s32.totalorder %s21, 0
      %p48 = por %p46, %p47
      %s50 = sadd.s32 %s49, 1
      %p53 = scmp.eq.s32.totalorder %s15, 1
      %p54 = scmp.ne.s32.totalorder %s49, %s51
      %p55 = scmp.eq.s32.totalorder %s15, 0
      %p56 = por %p54, %p55
      %p57 = scmp.ne.s32.totalorder %s49, %s51
      %p58 = scmp.eq.s32.totalorder %s20, 1
      %p59 = por %p57, %p58
      %p60 = scmp.ne.s32.totalorder %s51, %s52
      %p61 = scmp.eq.s32.totalorder %s20, 0
      %p62 = por %p60, %p61
      %p63 = scmp.ne.s32.totalorder %s51, %s52
      %p64 = scmp.eq.s32.totalorder %s21, 1
      %p65 = por %p63, %p64
      %p67 = scmp.ne.s32.totalorder %s52, %s66
      %p68 = scmp.eq.s32.totalorder %s21, 0
      %p69 = por %p67, %p68
      %s71 = sadd.s32 %s70, 1
      %p74 = scmp.eq.s32.totalorder %s15, 1
      %p75 = scmp.ne.s32.totalorder %s70, %s72
      %p76 = scmp.eq.s32.totalorder %s15, 0
      %p77 = por %p75, %p76
      %p78 = scmp.ne.s32.totalorder %s70, %s72
      %p79 = scmp.eq.s32.totalorder %s20, 1
      %p80 = por %p78, %p79
      %p81 = scmp.ne.s32.totalorder %s72, %s73
      %p82 = scmp.eq.s32.totalorder %s20, 0
      %p83 = por %p81, %p82
      %p84 = scmp.ne.s32.totalorder %s72, %s73
      %p85 = scmp.eq.s32.totalorder %s21, 1
      %p86 = por %p84, %p85
      %p88 = scmp.ne.s32.totalorder %s73, %s87
      %p89 = scmp.eq.s32.totalorder %s21, 0
      %p90 = por %p88, %p89
      %s91 = ssub.s32 %s15, %s22
      %p92 = scmp.eq.s32.totalorder %s91, 0
      %s94 = sadd.s32 %s93, 1
      %s95 = scalar_select %p92, %s93, %s94
      %p98 = pneg %p92
      %p99 = scmp.eq.s32.totalorder %s15, 1
      %p100 = por %p98, %p99
      %p101 = scmp.ne.s32.totalorder %s93, %s96
      %p102 = scmp.eq.s32.totalorder %s15, 0
      %p103 = por %p101, %p102
      %p104 = scmp.ne.s32.totalorder %s93, %s96
      %p105 = scmp.eq.s32.totalorder %s20, 1
      %p106 = por %p104, %p105
      %p107 = scmp.ne.s32.totalorder %s96, %s97
      %p108 = scmp.eq.s32.totalorder %s20, 0
      %p109 = por %p107, %p108
      %p110 = scmp.ne.s32.totalorder %s96, %s97
      %p111 = scmp.eq.s32.totalorder %s21, 1
      %p112 = por %p110, %p111
      %p114 = scmp.ne.s32.totalorder %s97, %s113
      %p115 = scmp.eq.s32.totalorder %s21, 0
      %p116 = por %p114, %p115
      %p117 = scmp.le.s32.totalorder 1, %s15
      %p118 = scmp.lt.s32.totalorder %s15, 3
      %p119 = pnand %p117, %p118
      %p120 = pneg %p119
      // Predicated region
      $region9: #{tpu_custom_call.1} parent=5 // pred_check
        _
      $region10: #{tpu_custom_call.1} parent=5 // pred_check_branch
        %122 = sbr.rel (%p119) target = $region12
      $region11: #{tpu_custom_call.1} parent=5 // pred_region
        %s123 = ssub.s32 %s15, 1
        // Predicated region
        $region13: #{tpu_custom_call.1} parent=11 // pred_check
          %p124 = pneg %p62
        $region14: #{tpu_custom_call.1} parent=11 // pred_check_branch
          %126 = sbr.rel (%p124) target = $region16
        $region15: #{tpu_custom_call.1} parent=11 // pred_region
          _
        $region16: #{tpu_custom_call.1} parent=11 // pred_fallthru
          _
        // Predicated region
        $region17: #{tpu_custom_call.1} parent=11 // pred_check
          %p127 = pneg %p83
        $region18: #{tpu_custom_call.1} parent=11 // pred_check_branch
          %129 = sbr.rel (%p127) target = $region20
        $region19: #{tpu_custom_call.1} parent=11 // pred_region
          _
        $region20: #{tpu_custom_call.1} parent=11 // pred_fallthru
          _
      $region12: #{tpu_custom_call.1} parent=5 // pred_fallthru
        _
      %p130 = scmp.lt.s32.totalorder %s15, 2
      // Predicated region
      $region21: #{tpu_custom_call.1} parent=5 // pred_check
        %p131 = pneg %p130
      $region22: #{tpu_custom_call.1} parent=5 // pred_check_branch
        %133 = sbr.rel (%p131) target = $region24
      $region23: #{tpu_custom_call.1} parent=5 // pred_region
        // Predicated region
        $region25: #{tpu_custom_call.1} parent=23 // pred_check
          %p134 = pneg %p35
        $region26: #{tpu_custom_call.1} parent=23 // pred_check_branch
          %136 = sbr.rel (%p134) target = $region28
        $region27: #{tpu_custom_call.1} parent=23 // pred_region
          %s137 = sand.u32 %s25, 1
          %s138 = scalar_lea.sflag [#allocation4], %s137
          %s139 = sand.u32 %s25, 1
          %s140 = smul.addr %s139, 24
          %s141 = scalar_lea.vmem [#allocation3], %s140
          %143 = vsyncadd %s138, 0
          %s144 = smul.addr %s15, 3
          %s145 = smul.addr %s144, 8
          %s146 = scalar_lea.hbm %s0, %s145
          %s148 = sshll.u32 %s146, 4
          %s149 = int_to_ptr.hbm [resolvable:$true] %s148
          %s150 = sshll.u32 %s141, 4
          %s151 = int_to_ptr.vmem [resolvable:$true] %s150
          %153 = dma.hbm_to_vmem [thread:$0]  %s149, 384, %s151, %s138
        $region28: #{tpu_custom_call.1} parent=23 // pred_fallthru
          _
      $region24: #{tpu_custom_call.1} parent=5 // pred_fallthru
        _
      %p154 = scmp.le.s32.totalorder 1, %s15
      %p155 = scmp.lt.s32.totalorder %s15, 3
      %p156 = pnand %p154, %p155
      %p157 = pneg %p156
      // Predicated region
      $region29: #{tpu_custom_call.1} parent=5 // pred_check
        _
      $region30: #{tpu_custom_call.1} parent=5 // pred_check_branch
        %159 = sbr.rel (%p156) target = $region32
      $region31: #{tpu_custom_call.1} parent=5 // pred_region
        %s160 = ssub.s32 %s15, 1
        %s161 = sand.u32 %s28, 1
        %s162 = scalar_lea.sflag [#allocation4], %s161
        %s163 = sand.u32 %s28, 1
        %s164 = smul.addr %s163, 24
        %s165 = scalar_lea.vmem [#allocation3], %s164
        // Predicated region
        $region33: #{tpu_custom_call.1} parent=31 // pred_check
          %p166 = pneg %p41
        $region34: #{tpu_custom_call.1} parent=31 // pred_check_branch
          %168 = sbr.rel (%p166) target = $region36
        $region35: #{tpu_custom_call.1} parent=31 // pred_region
          %170 = dma.done %s162, 384
        $region36: #{tpu_custom_call.1} parent=31 // pred_fallthru
          _
        %s171 = sand.u32 %s28, 1
        %s172 = scalar_lea.sflag [#allocation4], %s171
        %s173 = sand.u32 %s28, 1
        %s174 = smul.addr %s173, 24
        %s175 = scalar_lea.vmem [#allocation3], %s174
        %p176 = pneg %p41
        %p177 = pneg %p38
        %p178 = pneg %p62
        %p179 = pneg %p59
        %p180 = pneg %p83
        %p181 = pneg %p80
        %p182 = pneg %p109
        %p183 = pneg %p106
        %s184 = sand.u32 %s96, 1
        %s185 = scalar_lea.sflag [#allocation5], %s184
        %s186 = sand.u32 %s96, 1
        %s187 = smul.addr %s186, 24
        %s188 = scalar_lea.vmem [#allocation6], %s187
        %v189 = vld [vmem:[%s165] sm:$0xff]
        %v190 = vld [vmem:[%s165 + $0x8] sm:$0xff]
        %v191 = vld [vmem:[%s165 + $0x10] sm:$0xff]
        %192 = vst [vmem:[#allocation2] sm:$0xff] %v189
        %193 = vst [vmem:[#allocation2 + $0x8] sm:$0xff] %v190
        %vm194 = vcmask 261120
        %195 = vst.msk [vmem:[#allocation2 + $0x10] sm:$0xff] %vm194, %v191
        %v196 = vld [vmem:[%s165] sm:$0xff]
        %v197 = vld [vmem:[%s165 + $0x8] sm:$0xff]
        %v198 = vld [vmem:[%s165 + $0x10] sm:$0xff]
        %202 = vrot.lane.b32.xlu0 %v196, 127
        %v203 = vpop.permute.xlu0 %202
        %204 = vrot.lane.b32.xlu0 %v197, 127
        %v205 = vpop.permute.xlu0 %204
        %206 = vrot.lane.b32.xlu0 %v198, 127
        %v207 = vpop.permute.xlu0 %206
        %vm208 = vcmask 1039360
        %v209 = vsel %vm208, %v203, %v205
        %v210 = vsel %vm208, %v205, %v207
        %214 = vst [vmem:[#allocation2 + $0x18] sm:$0xff] %v209
        %215 = vst [vmem:[#allocation2 + $0x20] sm:$0xff] %v210
        %216 = vst.msk [vmem:[#allocation2 + $0x28] sm:$0xff] %vm194, %v207
        %v217 = vld [vmem:[%s165] sm:$0xff]
        %v218 = vld [vmem:[%s165 + $0x8] sm:$0xff]
        %v219 = vld [vmem:[%s165 + $0x10] sm:$0xff]
        %223 = vrot.lane.b32.xlu0 %v217, 126
        %v224 = vpop.permute.xlu0 %223
        %225 = vrot.lane.b32.xlu0 %v218, 126
        %v226 = vpop.permute.xlu0 %225
        %227 = vrot.lane.b32.xlu0 %v219, 126
        %v228 = vpop.permute.xlu0 %227
        %vm229 = vcmask 1031168
        %v230 = vsel %vm229, %v224, %v226
        %v231 = vsel %vm229, %v226, %v228
        %235 = vst [vmem:[#allocation2 + $0x30] sm:$0xff] %v230
        %236 = vst [vmem:[#allocation2 + $0x38] sm:$0xff] %v231
        %237 = vst.msk [vmem:[#allocation2 + $0x40] sm:$0xff] %vm194, %v228
        %v238 = vld [vmem:[%s165] sm:$0xff]
        %v239 = vld [vmem:[%s165 + $0x8] sm:$0xff]
        %v240 = vld [vmem:[%s165 + $0x10] sm:$0xff]
        %244 = vrot.lane.b32.xlu0 %v238, 110
        %v245 = vpop.permute.xlu0 %244
        %246 = vrot.lane.b32.xlu0 %v239, 110
        %v247 = vpop.permute.xlu0 %246
        %248 = vrot.lane.b32.xlu0 %v240, 110
        %v249 = vpop.permute.xlu0 %248
        %vm250 = vcmask 900096
        %v251 = vsel %vm250, %v245, %v247
        %v252 = vsel %vm250, %v247, %v249
        %256 = vst [vmem:[#allocation2 + $0x48] sm:$0xff] %v251
        %257 = vst [vmem:[#allocation2 + $0x50] sm:$0xff] %v252
        %258 = vst.msk [vmem:[#allocation2 + $0x58] sm:$0xff] %vm194, %v249
        %v259 = vld [vmem:[%s165] sm:$0xff]
        %v260 = vld [vmem:[%s165 + $0x8] sm:$0xff]
        %v261 = vld [vmem:[%s165 + $0x10] sm:$0xff]
        %265 = vrot.lane.b32.xlu0 %v259, 109
        %v266 = vpop.permute.xlu0 %265
        %267 = vrot.lane.b32.xlu0 %v260, 109
        %v268 = vpop.permute.xlu0 %267
        %269 = vrot.lane.b32.xlu0 %v261, 109
        %v270 = vpop.permute.xlu0 %269
        %vm271 = vcmask 891904
        %v272 = vsel %vm271, %v266, %v268
        %v273 = vsel %vm271, %v268, %v270
        %277 = vst [vmem:[#allocation2 + $0x60] sm:$0xff] %v272
        %278 = vst [vmem:[#allocation2 + $0x68] sm:$0xff] %v273
        %279 = vst.msk [vmem:[#allocation2 + $0x70] sm:$0xff] %vm194, %v270
        %v280 = vld [vmem:[%s165] sm:$0xff]
        %v281 = vld [vmem:[%s165 + $0x8] sm:$0xff]
        %v282 = vld [vmem:[%s165 + $0x10] sm:$0xff]
        %286 = vrot.lane.b32.xlu0 %v280, 108
        %v287 = vpop.permute.xlu0 %286
        %288 = vrot.lane.b32.xlu0 %v281, 108
        %v289 = vpop.permute.xlu0 %288
        %290 = vrot.lane.b32.xlu0 %v282, 108
        %v291 = vpop.permute.xlu0 %290
        %vm292 = vcmask 883712
        %v293 = vsel %vm292, %v287, %v289
        %v294 = vsel %vm292, %v289, %v291
        %298 = vst [vmem:[#allocation2 + $0x78] sm:$0xff] %v293
        %299 = vst [vmem:[#allocation2 + $0x80] sm:$0xff] %v294
        %300 = vst.msk [vmem:[#allocation2 + $0x88] sm:$0xff] %vm194, %v291
        %v301 = vld [vmem:[%s165] sm:$0xff]
        %v302 = vld [vmem:[%s165 + $0x8] sm:$0xff]
        %v303 = vld [vmem:[%s165 + $0x10] sm:$0xff]
        %307 = vrot.lane.b32.xlu0 %v301, 92
        %v308 = vpop.permute.xlu0 %307
        %309 = vrot.lane.b32.xlu0 %v302, 92
        %v310 = vpop.permute.xlu0 %309
        %311 = vrot.lane.b32.xlu0 %v303, 92
        %v312 = vpop.permute.xlu0 %311
        %vm313 = vcmask 752640
        %v314 = vsel %vm313, %v308, %v310
        %v315 = vsel %vm313, %v310, %v312
        %319 = vst [vmem:[#allocation2 + $0x90] sm:$0xff] %v314
        %320 = vst [vmem:[#allocation2 + $0x98] sm:$0xff] %v315
        %321 = vst.msk [vmem:[#allocation2 + $0xa0] sm:$0xff] %vm194, %v312
        %v322 = vld [vmem:[%s165] sm:$0xff]
        %v323 = vld [vmem:[%s165 + $0x8] sm:$0xff]
        %v324 = vld [vmem:[%s165 + $0x10] sm:$0xff]
        %328 = vrot.lane.b32.xlu0 %v322, 91
        %v329 = vpop.permute.xlu0 %328
        %330 = vrot.lane.b32.xlu0 %v323, 91
        %v331 = vpop.permute.xlu0 %330
        %332 = vrot.lane.b32.xlu0 %v324, 91
        %v333 = vpop.permute.xlu0 %332
        %vm334 = vcmask 744448
        %v335 = vsel %vm334, %v329, %v331
        %v336 = vsel %vm334, %v331, %v333
        %340 = vst [vmem:[#allocation2 + $0xa8] sm:$0xff] %v335
        %341 = vst [vmem:[#allocation2 + $0xb0] sm:$0xff] %v336
        %342 = vst.msk [vmem:[#allocation2 + $0xb8] sm:$0xff] %vm194, %v333
        %v343 = vld [vmem:[%s165] sm:$0xff]
        %v344 = vld [vmem:[%s165 + $0x8] sm:$0xff]
        %v345 = vld [vmem:[%s165 + $0x10] sm:$0xff]
        %349 = vrot.lane.b32.xlu0 %v343, 90
        %v350 = vpop.permute.xlu0 %349
        %351 = vrot.lane.b32.xlu0 %v344, 90
        %v352 = vpop.permute.xlu0 %351
        %353 = vrot.lane.b32.xlu0 %v345, 90
        %v354 = vpop.permute.xlu0 %353
        %vm355 = vcmask 736256
        %v356 = vsel %vm355, %v350, %v352
        %v357 = vsel %vm355, %v352, %v354
        %361 = vst [vmem:[#allocation2 + $0xc0] sm:$0xff] %v356
        %362 = vst [vmem:[#allocation2 + $0xc8] sm:$0xff] %v357
        %363 = vst.msk [vmem:[#allocation2 + $0xd0] sm:$0xff] %vm194, %v354
        %v364 = vld [vmem:[%s1] sm:$0xff]
        %v365 = vld [vmem:[#allocation2] sm:$0xff]
        %v366 = vld [vmem:[#allocation2 + $0x8] sm:$0xff]
        %v367 = vld [vmem:[#allocation2 + $0x10] sm:$0xff]
        %v368 = vld [vmem:[#allocation2 + $0x18] sm:$0xff]
        %v369 = vld [vmem:[#allocation2 + $0x20] sm:$0xff]
        %v370 = vld [vmem:[#allocation2 + $0x28] sm:$0xff]
        %v371 = vld [vmem:[#allocation2 + $0x30] sm:$0xff]
        %v372 = vld [vmem:[#allocation2 + $0x38] sm:$0xff]
        %v373 = vld [vmem:[#allocation2 + $0x40] sm:$0xff]
        %v374 = vld [vmem:[#allocation2 + $0x48] sm:$0xff]
        %v375 = vld [vmem:[#allocation2 + $0x50] sm:$0xff]
        %v376 = vld [vmem:[#allocation2 + $0x58] sm:$0xff]
        %v377 = vld [vmem:[#allocation2 + $0x60] sm:$0xff]
        %v378 = vld [vmem:[#allocation2 + $0x68] sm:$0xff]
        %v379 = vld [vmem:[#allocation2 + $0x70] sm:$0xff]
        %v380 = vld [vmem:[#allocation2 + $0x78] sm:$0xff]
        %v381 = vld [vmem:[#allocation2 + $0x80] sm:$0xff]
        %v382 = vld [vmem:[#allocation2 + $0x88] sm:$0xff]
        %v383 = vld [vmem:[#allocation2 + $0x90] sm:$0xff]
        %v384 = vld [vmem:[#allocation2 + $0x98] sm:$0xff]
        %v385 = vld [vmem:[#allocation2 + $0xa0] sm:$0xff]
        %v386 = vld [vmem:[#allocation2 + $0xa8] sm:$0xff]
        %v387 = vld [vmem:[#allocation2 + $0xb0] sm:$0xff]
        %v388 = vld [vmem:[#allocation2 + $0xb8] sm:$0xff]
        %v389 = vld [vmem:[#allocation2 + $0xc0] sm:$0xff]
        %v390 = vld [vmem:[#allocation2 + $0xc8] sm:$0xff]
        %v391 = vld [vmem:[#allocation2 + $0xd0] sm:$0xff]
        %v392 = vld [vmem:[%s2] sm:$0xff]
        %394 = vset.pattern.permute.xlu0 0
        %395 = vperm.xlu0 %394, %v392
        %v396 = vpop.permute.xlu0 %395
        %vm398 = vcmask 588800
        %v400 = vsel %vm398, %v364, 0
        %402 = vmatpush.msra.mxu0 0.0
        %403 = vmatpush.msra.mxu0 0.0
        %404 = vmatpush.msra.mxu0 0.0
        %405 = vmatpush.msra.mxu0 0.0
        %406 = vmatpush.msra.mxu0 0.0
        %407 = vmatpush.msra.mxu0 0.0
        %408 = vmatpush.msra.mxu0 0.0
        %409 = vmatpush.msra.mxu0 %v389
        %410 = vmatpush.msra.mxu0 %v386
        %411 = vmatpush.msra.mxu0 %v383
        %412 = vmatpush.msra.mxu0 %v380
        %413 = vmatpush.msra.mxu0 %v377
        %414 = vmatpush.msra.mxu0 %v374
        %415 = vmatpush.msra.mxu0 %v371
        %416 = vmatpush.msra.mxu0 %v368
        %417 = vmatpush.msra.mxu0 %v365
        %418 = vmatmul.f32.gmra.mxu0 %v400
        %v419 = vpop.f32.mrf.mxu0
        %v420 = vadd.f32 %v396, %v419
        %421 = vdwg.mxu0
        %422 = vmatpush.msra.mxu0 0.0
        %423 = vmatpush.msra.mxu0 0.0
        %424 = vmatpush.msra.mxu0 0.0
        %425 = vmatpush.msra.mxu0 0.0
        %426 = vmatpush.msra.mxu0 0.0
        %427 = vmatpush.msra.mxu0 0.0
        %428 = vmatpush.msra.mxu0 0.0
        %429 = vmatpush.msra.mxu0 %v390
        %430 = vmatpush.msra.mxu0 %v387
        %431 = vmatpush.msra.mxu0 %v384
        %432 = vmatpush.msra.mxu0 %v381
        %433 = vmatpush.msra.mxu0 %v378
        %434 = vmatpush.msra.mxu0 %v375
        %435 = vmatpush.msra.mxu0 %v372
        %436 = vmatpush.msra.mxu0 %v369
        %437 = vmatpush.msra.mxu0 %v366
        %438 = vmatmul.f32.gmra.mxu0 %v400
        %v439 = vpop.f32.mrf.mxu0
        %v440 = vadd.f32 %v396, %v439
        %441 = vdwg.mxu0
        %442 = vmatpush.msra.mxu0 0.0
        %443 = vmatpush.msra.mxu0 0.0
        %444 = vmatpush.msra.mxu0 0.0
        %445 = vmatpush.msra.mxu0 0.0
        %446 = vmatpush.msra.mxu0 0.0
        %447 = vmatpush.msra.mxu0 0.0
        %448 = vmatpush.msra.mxu0 0.0
        %449 = vmatpush.msra.mxu0 %v391
        %450 = vmatpush.msra.mxu0 %v388
        %451 = vmatpush.msra.mxu0 %v385
        %452 = vmatpush.msra.mxu0 %v382
        %453 = vmatpush.msra.mxu0 %v379
        %454 = vmatpush.msra.mxu0 %v376
        %455 = vmatpush.msra.mxu0 %v373
        %456 = vmatpush.msra.mxu0 %v370
        %457 = vmatpush.msra.mxu0 %v367
        %458 = vmatmul.f32.gmra.mxu0 %v400
        %v459 = vpop.f32.mrf.mxu0
        %v460 = vadd.f32 %v396, %v459
        %461 = vdwg.mxu0
        %vm462 = vcmp.ge.f32.partialorder %v420, 0.0
        %vm463 = vcmp.ge.f32.partialorder %v440, 0.0
        %vm464 = vcmp.ge.f32.partialorder %v460, 0.0
        %v465 = vmul.f32 %v420, 0.2
        %v466 = vmul.f32 %v440, 0.2
        %v467 = vmul.f32 %v460, 0.2
        %v468 = vsel %vm462, %v420, %v465
        %v469 = vsel %vm463, %v440, %v466
        %v470 = vsel %vm464, %v460, %v467
        %v471 = vmul.f32 %v468, 1.4142135
        %v472 = vmul.f32 %v469, 1.4142135
        %v473 = vmul.f32 %v470, 1.4142135
        %474 = vst [vmem:[%s188] sm:$0xff] %v471
        %475 = vst [vmem:[%s188 + $0x8] sm:$0xff] %v472
        %476 = vst.msk [vmem:[%s188 + $0x10] sm:$0xff] %vm194, %v473
        %s477 = sand.u32 %s96, 1
        %s478 = scalar_lea.sflag [#allocation5], %s477
        %s479 = sand.u32 %s96, 1
        %s480 = smul.addr %s479, 24
        %s481 = scalar_lea.vmem [#allocation6], %s480
        // Predicated region
        $region37: #{tpu_custom_call.1} parent=31 // pred_check
          %p482 = pneg %p106
        $region38: #{tpu_custom_call.1} parent=31 // pred_check_branch
          %484 = sbr.rel (%p482) target = $region40
        $region39: #{tpu_custom_call.1} parent=31 // pred_region
          %486 = vsyncadd %s478, 0
          %s487 = smul.addr %s20, 3
          %s488 = smul.addr %s487, 8
          %s489 = scalar_lea.hbm %s3, %s488
          %s491 = sshll.u32 %s481, 4
          %s492 = int_to_ptr.vmem [resolvable:$true] %s491
          %s493 = sshll.u32 %s489, 4
          %s494 = int_to_ptr.hbm [resolvable:$true] %s493
          %496 = dma.vmem_to_hbm [thread:$0]  %s492, 384, %s494, %s478
        $region40: #{tpu_custom_call.1} parent=31 // pred_fallthru
          _
      $region32: #{tpu_custom_call.1} parent=5 // pred_fallthru
        _
      %p497 = scmp.le.s32.totalorder 2, %s15
      // Predicated region
      $region41: #{tpu_custom_call.1} parent=5 // pred_check
        %p498 = pneg %p497
      $region42: #{tpu_custom_call.1} parent=5 // pred_check_branch
        %500 = sbr.rel (%p498) target = $region44
      $region43: #{tpu_custom_call.1} parent=5 // pred_region
        %s501 = ssub.s32 %s15, 2
        // Predicated region
        $region45: #{tpu_custom_call.1} parent=43 // pred_check
          %p502 = pneg %p112
        $region46: #{tpu_custom_call.1} parent=43 // pred_check_branch
          %504 = sbr.rel (%p502) target = $region48
        $region47: #{tpu_custom_call.1} parent=43 // pred_region
          %s505 = sand.u32 %s97, 1
          %s506 = scalar_lea.sflag [#allocation5], %s505
          %s507 = sand.u32 %s97, 1
          %s508 = smul.addr %s507, 24
          %s509 = scalar_lea.vmem [#allocation6], %s508
          %511 = dma.done %s506, 384
        $region48: #{tpu_custom_call.1} parent=43 // pred_fallthru
          _
      $region44: #{tpu_custom_call.1} parent=5 // pred_fallthru
        _
    $region6: #{tpu_custom_call.1} parent=1 // loop_footer
      %s19 = sadd.s32 1, %s15
    $region7: #{tpu_custom_call.1} parent=1 // loop_footer_branch
      %14 = sbr.rel target = $region3
    $region8: #{tpu_custom_call.1} parent=1 // loop_exit
      _
    %512 = vsyncpa [#allocation4], 1
    %s513 = scalar_lea.sflag [#allocation4], 1
    %514 = vsyncpa %s513, 1
    %515 = vsyncpa [#allocation5], 1
    %s516 = scalar_lea.sflag [#allocation5], 1
    %517 = vsyncpa %s516, 1

</llo_original>
